<compile_context>
chip_gen: v7x
topology: tpu7x:2x2x1
jax: 0.10.0
libtpu: 0.0.40
codegen_flags: <defaults>
</compile_context>

<pallas_src>
import functools

import jax
import jax.numpy as jnp
from jax.experimental import pallas as pl
from jax.experimental.pallas import tpu as pltpu


def _linear_decoder_kernel(x_ref, w1_ref, b1_ref, w2_ref, b2_ref, o_ref,
                           acc_ref, *, inv_l):
    """Streams x over the L grid axis into an f32 partial sum; runs the
    (mean -> Linear -> ReLU -> Linear) head once on the last L step."""
    l = pl.program_id(1)

    @pl.when(l == 0)
    def _():
        acc_ref[...] = jnp.zeros_like(acc_ref)

    # Partial sum over this sequence tile (VPU adds, f32 accumulator).
    acc_ref[...] += jnp.sum(x_ref[...].astype(jnp.float32), axis=1)

    @pl.when(l == pl.num_programs(1) - 1)
    def _():
        pooled = acc_ref[...] * inv_l                     # (B_t, D) f32: exact mean
        wdt = w1_ref.dtype                                # matmul operand dtype
        h = jnp.dot(pooled.astype(wdt), w1_ref[...],
                    preferred_element_type=jnp.float32)
        h = jnp.maximum(h + b1_ref[...].astype(jnp.float32), 0.0)
        # TODO(synk): dropout omitted (inference / eval semantics only).
        out = jnp.dot(h.astype(wdt), w2_ref[...],
                      preferred_element_type=jnp.float32)
        o_ref[...] = (out + b2_ref[...].astype(jnp.float32)).astype(o_ref.dtype)


def _tpu_budgets():
    """(physical VMEM bytes per TensorCore, TensorCores per chip).
    Conservative defaults if the query API is unavailable."""
    vmem = 128 << 20
    cores = 1
    try:
        info = pltpu.get_tpu_info()
        vmem = int(getattr(info, "vmem_capacity_bytes", vmem))
        for name in ("num_tensorcores", "tensorcores_per_chip",
                     "num_cores", "num_cores_per_chip"):
            val = getattr(info, name, None)
            if val:
                cores = int(val)
                break
    except Exception:
        pass
    # v7x heuristic: 64 MiB VMEM per TC implies the 2-TC generation.
    if cores <= 1 and vmem <= (64 << 20):
        cores = 2
    return vmem, cores


def _pick_l_tile(L, b_tile, D, itemsize, max_tile_bytes):
    """Pick (l_tile, L_padded). l_tile obeys the dtype sublane-packing minimum
    (8 f32 / 16 bf16 / 32 int8-fp8) and the VMEM byte budget; prefer an exact
    divisor of L, then whole-L (block == full dim is always legal), and only
    zero-pad L (exact for the mean, which divides by the true L) when L is
    awkward AND too large for a single block."""
    min_mult = {4: 8, 2: 16, 1: 32}.get(itemsize, 8)
    row_bytes = max(b_tile * D * itemsize, 1)
    budget_rows = max((max_tile_bytes // row_bytes) // min_mult, 1) * min_mult

    cand = (min(L, budget_rows) // min_mult) * min_mult
    while cand >= min_mult:
        if L % cand == 0:
            return cand, L
        cand -= min_mult
    if L * row_bytes <= max_tile_bytes:
        return L, L
    l_tile = budget_rows
    l_pad = l_tile * (-(-L // l_tile))
    return l_tile, l_pad


def linear_decoder(x, w1, b1, w2, b2, *, weights_dtype=None):
    """Pallas port of LinearDecoder.forward (inference).

    x: (B, L, D) float32 or bfloat16; weights stored (in, out) so the head
    computes x @ W. Returns (B, n_class) float32. Pass bf16 x (upstream) and
    weights_dtype=jnp.bfloat16 for the fast path; accumulation stays f32."""
    B, L, D = x.shape
    d_ff = w1.shape[1]
    n_class = w2.shape[1]
    itemsize = x.dtype.itemsize

    if weights_dtype is not None:
        w1 = w1.astype(weights_dtype)
        b1 = b1.astype(weights_dtype)
        w2 = w2.astype(weights_dtype)
        b2 = b2.astype(weights_dtype)
    w_item = w1.dtype.itemsize

    # Lane-dense classifier output: pad n_class up to a multiple of 128.
    n_pad = 128 * pl.cdiv(n_class, 128)
    if n_pad != n_class:
        w2p = jnp.pad(w2, ((0, 0), (0, n_pad - n_class)))
        b2p = jnp.pad(b2, ((0, 0), (0, n_pad - n_class)))
    else:
        w2p, b2p = w2, b2

    phys_vmem, n_cores = _tpu_budgets()
    vmem_cap = max(phys_vmem - (8 << 20), 16 << 20)       # ~8 MiB headroom

    # Batch split only when it buys megacore parallelism (2-TC chips) and keeps
    # the output block (b_tile, n_pad) sublane-legal.
    b_tile = B // 2 if (n_cores >= 2 and B % 16 == 0) else B

    # Resident (single-buffered) weights + small blocks; the rest of VMEM feeds
    # the pipelined x stream.
    w_bytes = (D * d_ff + d_ff) * w_item + (d_ff * n_pad + n_pad) * w_item
    out_bytes = b_tile * n_pad * 4
    acc_bytes = b_tile * D * 4
    resident = w_bytes + 2 * out_bytes + acc_bytes + (4 << 20)  # + internal scratch slack
    max_tile_bytes = min(max((vmem_cap - resident) // 2, 1 << 20), 32 << 20)

    l_tile, l_padded = _pick_l_tile(L, b_tile, D, itemsize, max_tile_bytes)
    if l_padded != L:
        # Correctness fallback for awkward L: zero rows add nothing to the sum
        # and inv_l uses the true L, so the mean stays exact.
        x = jnp.pad(x, ((0, 0), (0, l_padded - L), (0, 0)))
    grid = (B // b_tile, l_padded // l_tile)

    x_tile_bytes = b_tile * l_tile * D * itemsize
    # Deeper x pipelining on 2-TC (v7x-class) parts when VMEM allows.
    x_buffers = 3 if (n_cores >= 2 and grid[1] >= 3 and
                      3 * x_tile_bytes + resident <= vmem_cap) else 2

    need = x_buffers * x_tile_bytes + resident
    vmem_limit = int(min(max(need, 16 << 20), vmem_cap))

    cost = pl.CostEstimate(
        flops=2 * B * l_padded * D + 2 * B * D * d_ff + 2 * B * d_ff * n_pad,
        transcendentals=0,
        bytes_accessed=B * l_padded * D * itemsize + w_bytes + B * n_pad * 4,
    )

    kernel = functools.partial(_linear_decoder_kernel, inv_l=1.0 / L)

    out_padded = pl.pallas_call(
        kernel,
        out_shape=jax.ShapeDtypeStruct((B, n_pad), jnp.float32),
        grid_spec=pltpu.PrefetchScalarGridSpec(
            num_scalar_prefetch=0,
            grid=grid,
            in_specs=[
                # Streaming x tile: the only block whose index changes.
                pl.BlockSpec((b_tile, l_tile, D), lambda b, l: (b, l, 0),
                             pipeline_mode=pl.Buffered(x_buffers)),
                # Constant-index resident weights/biases: single buffer.
                pl.BlockSpec((D, d_ff), lambda b, l: (0, 0),
                             pipeline_mode=pl.Buffered(1)),
                pl.BlockSpec((1, d_ff), lambda b, l: (0, 0),
                             pipeline_mode=pl.Buffered(1)),
                pl.BlockSpec((d_ff, n_pad), lambda b, l: (0, 0),
                             pipeline_mode=pl.Buffered(1)),
                pl.BlockSpec((1, n_pad), lambda b, l: (0, 0),
                             pipeline_mode=pl.Buffered(1)),
            ],
            out_specs=pl.BlockSpec((b_tile, n_pad), lambda b, l: (b, 0)),
            scratch_shapes=[pltpu.VMEM((b_tile, D), jnp.float32)],
        ),
        compiler_params=pltpu.CompilerParams(
            dimension_semantics=("parallel", "arbitrary"),
            vmem_limit_bytes=vmem_limit,
        ),
        cost_estimate=cost,
    )(x, w1, b1, w2p, b2p)

    return out_padded[:, :n_class]


def init_params(key, d_model, n_class):
    """Deterministic init matching nn.Linear shapes (weights stored as (in, out),
    so the kernel computes x @ W)."""
    d_ff = d_model // 4
    k1, k2, k3, k4 = jax.random.split(key, 4)
    lim1 = 1.0 / jnp.sqrt(d_model)
    lim2 = 1.0 / jnp.sqrt(d_ff)
    w1 = jax.random.uniform(k1, (d_model, d_ff), jnp.float32, -lim1, lim1)
    b1 = jax.random.uniform(k2, (1, d_ff), jnp.float32, -lim1, lim1)
    w2 = jax.random.uniform(k3, (d_ff, n_class), jnp.float32, -lim2, lim2)
    b2 = jax.random.uniform(k4, (1, n_class), jnp.float32, -lim2, lim2)
    return w1, b1, w2, b2


if __name__ == "__main__":
    B, L, d_model, n_class = 2, 8, 32, 4

    key = jax.random.PRNGKey(0)
    kx, kp = jax.random.split(key)
    x = jax.random.normal(kx, (B, L, d_model), dtype=jnp.float32)
    w1, b1, w2, b2 = init_params(kp, d_model, n_class)

    # Pure-JAX reference (module semantics: mean over L -> Linear -> ReLU -> Linear).
    pooled = jnp.mean(x, axis=1)
    ref = jnp.maximum(pooled @ w1 + b1, 0.0) @ w2 + b2

    # Exact path: f32 x, f32 weights.
    out = jax.block_until_ready(linear_decoder(x, w1, b1, w2, b2))
    assert out.shape == (B, n_class)
    assert jnp.allclose(out, ref, atol=1e-5, rtol=1e-5)

    # Fast path: bf16 x stream + bf16 resident weights, f32 accumulation.
    out_bf16 = jax.block_until_ready(
        linear_decoder(x.astype(jnp.bfloat16), w1, b1, w2, b2,
                       weights_dtype=jnp.bfloat16))
    assert out_bf16.shape == (B, n_class)
    assert jnp.allclose(out_bf16, ref, atol=7e-2, rtol=7e-2)

    print("KERNEL_OK")
</pallas_src>

<mosaic_0001>
module attributes {stable_mosaic.version = 11 : i64} {
  func.func @_linear_decoder_kernel(%arg0: i32, %arg1: i32, %arg2: memref<2x8x32xf32, #tpu.memory_space<vmem>>, %arg3: memref<32x8xf32, #tpu.memory_space<vmem>>, %arg4: memref<1x8xf32, #tpu.memory_space<vmem>>, %arg5: memref<8x128xf32, #tpu.memory_space<vmem>>, %arg6: memref<1x128xf32, #tpu.memory_space<vmem>>, %arg7: memref<2x128xf32, #tpu.memory_space<vmem>>, %arg8: memref<2x32xf32, #tpu.memory_space<vmem>>) attributes {dimension_semantics = [#tpu.dimension_semantics<parallel>, #tpu.dimension_semantics<arbitrary>], iteration_bounds = array<i64: 1, 1>, scalar_prefetch = 0 : i64, scratch_operands = 1 : i64, tpu.core_type = #tpu.core_type<tc>, window_params = [{pipeline_mode = #tpu.pipeline_mode<double_buffered>, transform_indices = @transform_0, window_bounds = array<i64: 2, 8, 32>}, {pipeline_mode = #tpu.pipeline_mode<synchronous>, transform_indices = @transform_1, window_bounds = array<i64: 32, 8>}, {pipeline_mode = #tpu.pipeline_mode<synchronous>, transform_indices = @transform_2, window_bounds = array<i64: 1, 8>}, {pipeline_mode = #tpu.pipeline_mode<synchronous>, transform_indices = @transform_3, window_bounds = array<i64: 8, 128>}, {pipeline_mode = #tpu.pipeline_mode<synchronous>, transform_indices = @transform_4, window_bounds = array<i64: 1, 128>}, {transform_indices = @transform_5, window_bounds = array<i64: 2, 128>}]} {
    %c0_i32 = arith.constant 0 : i32
    %0 = arith.cmpi eq, %arg1, %c0_i32 : i32
    %1 = arith.extui %0 : i1 to i32
    %c0_i32_0 = arith.constant 0 : i32
    %2 = arith.cmpi ne, %1, %c0_i32_0 : i32
    scf.if %2 {
      %cst_9 = arith.constant 0.000000e+00 : f32
      %11 = vector.broadcast %cst_9 : f32 to vector<2x32xf32>
      %c0_10 = arith.constant 0 : index
      %c0_11 = arith.constant 0 : index
      %12 = vector.load %arg8[%c0_10, %c0_11] : memref<2x32xf32, #tpu.memory_space<vmem>>, vector<2x32xf32>
      tpu.vector_store %arg8[%c0_10, %c0_11], %11 {strides = array<i32>} : memref<2x32xf32, #tpu.memory_space<vmem>>, vector<2x32xf32>,
    } else {
    }
    %c0 = arith.constant 0 : index
    %c0_1 = arith.constant 0 : index
    %3 = vector.load %arg8[%c0, %c0_1] : memref<2x32xf32, #tpu.memory_space<vmem>>, vector<2x32xf32>
    %c0_2 = arith.constant 0 : index
    %c0_3 = arith.constant 0 : index
    %c0_4 = arith.constant 0 : index
    %4 = vector.load %arg2[%c0_2, %c0_3, %c0_4] : memref<2x8x32xf32, #tpu.memory_space<vmem>>, vector<2x8x32xf32>
    %cst = arith.constant dense<0.000000e+00> : vector<2x32xf32>
    %5 = vector.multi_reduction <add>, %4, %cst [1] : vector<2x8x32xf32> to vector<2x32xf32>
    %6 = arith.addf %3, %5 : vector<2x32xf32>
    %c0_5 = arith.constant 0 : index
    %c0_6 = arith.constant 0 : index
    %7 = vector.load %arg8[%c0_5, %c0_6] : memref<2x32xf32, #tpu.memory_space<vmem>>, vector<2x32xf32>
    tpu.vector_store %arg8[%c0_5, %c0_6], %6 {strides = array<i32>} : memref<2x32xf32, #tpu.memory_space<vmem>>, vector<2x32xf32>,
    %c0_i32_7 = arith.constant 0 : i32
    %8 = arith.cmpi eq, %arg1, %c0_i32_7 : i32
    %9 = arith.extui %8 : i1 to i32
    %c0_i32_8 = arith.constant 0 : i32
    %10 = arith.cmpi ne, %9, %c0_i32_8 : i32
    scf.if %10 {
      %c0_9 = arith.constant 0 : index
      %c0_10 = arith.constant 0 : index
      %11 = vector.load %arg8[%c0_9, %c0_10] : memref<2x32xf32, #tpu.memory_space<vmem>>, vector<2x32xf32>
      %cst_11 = arith.constant 1.250000e-01 : f32
      %12 = vector.broadcast %cst_11 : f32 to vector<2x32xf32>
      %13 = arith.mulf %11, %12 : vector<2x32xf32>
      %c0_12 = arith.constant 0 : index
      %c0_13 = arith.constant 0 : index
      %14 = vector.load %arg3[%c0_12, %c0_13] : memref<32x8xf32, #tpu.memory_space<vmem>>, vector<32x8xf32>
      %cst_14 = arith.constant dense<0.000000e+00> : vector<2x8xf32>
      %15 = tpu.matmul %13, %14, %cst_14 {dimension_numbers = #tpu.dot_dimension_numbers<[1], [0], [0], [1], [0, 0, 1, 1], [], []>} : vector<2x32xf32>, vector<32x8xf32>, vector<2x8xf32> -> vector<2x8xf32>
      %c0_15 = arith.constant 0 : index
      %c0_16 = arith.constant 0 : index
      %16 = vector.load %arg4[%c0_15, %c0_16] : memref<1x8xf32, #tpu.memory_space<vmem>>, vector<1x8xf32>
      %17 = vector.broadcast %16 : vector<1x8xf32> to vector<2x8xf32>
      %18 = arith.addf %15, %17 : vector<2x8xf32>
      %cst_17 = arith.constant 0.000000e+00 : f32
      %19 = vector.broadcast %cst_17 : f32 to vector<2x8xf32>
      %20 = arith.maximumf %18, %19 : vector<2x8xf32>
      %c0_18 = arith.constant 0 : index
      %c0_19 = arith.constant 0 : index
      %21 = vector.load %arg5[%c0_18, %c0_19] : memref<8x128xf32, #tpu.memory_space<vmem>>, vector<8x128xf32>
      %cst_20 = arith.constant dense<0.000000e+00> : vector<2x128xf32>
      %22 = tpu.matmul %20, %21, %cst_20 {dimension_numbers = #tpu.dot_dimension_numbers<[1], [0], [0], [1], [0, 0, 1, 1], [], []>} : vector<2x8xf32>, vector<8x128xf32>, vector<2x128xf32> -> vector<2x128xf32>
      %c0_21 = arith.constant 0 : index
      %c0_22 = arith.constant 0 : index
      %23 = vector.load %arg6[%c0_21, %c0_22] : memref<1x128xf32, #tpu.memory_space<vmem>>, vector<1x128xf32>
      %24 = vector.broadcast %23 : vector<1x128xf32> to vector<2x128xf32>
      %25 = arith.addf %22, %24 : vector<2x128xf32>
      %c0_23 = arith.constant 0 : index
      %c0_24 = arith.constant 0 : index
      %26 = vector.load %arg7[%c0_23, %c0_24] : memref<2x128xf32, #tpu.memory_space<vmem>>, vector<2x128xf32>
      tpu.vector_store %arg7[%c0_23, %c0_24], %25 {strides = array<i32>} : memref<2x128xf32, #tpu.memory_space<vmem>>, vector<2x128xf32>,
    } else {
    }
    return
  }
  func.func @transform_0(%arg0: i32, %arg1: i32) -> (i32, i32, i32) {
    %c0_i32 = arith.constant 0 : i32
    %c0_i32_0 = arith.constant 0 : i32
    return %arg0, %arg1, %c0_i32 : i32, i32, i32
  }
  func.func @transform_1(%arg0: i32, %arg1: i32) -> (i32, i32) {
    %c0_i32 = arith.constant 0 : i32
    %c0_i32_0 = arith.constant 0 : i32
    %c0_i32_1 = arith.constant 0 : i32
    return %c0_i32, %c0_i32_0 : i32, i32
  }
  func.func @transform_2(%arg0: i32, %arg1: i32) -> (i32, i32) {
    %c0_i32 = arith.constant 0 : i32
    %c0_i32_0 = arith.constant 0 : i32
    %c0_i32_1 = arith.constant 0 : i32
    return %c0_i32, %c0_i32_0 : i32, i32
  }
  func.func @transform_3(%arg0: i32, %arg1: i32) -> (i32, i32) {
    %c0_i32 = arith.constant 0 : i32
    %c0_i32_0 = arith.constant 0 : i32
    %c0_i32_1 = arith.constant 0 : i32
    return %c0_i32, %c0_i32_0 : i32, i32
  }
  func.func @transform_4(%arg0: i32, %arg1: i32) -> (i32, i32) {
    %c0_i32 = arith.constant 0 : i32
    %c0_i32_0 = arith.constant 0 : i32
    %c0_i32_1 = arith.constant 0 : i32
    return %c0_i32, %c0_i32_0 : i32, i32
  }
  func.func @transform_5(%arg0: i32, %arg1: i32) -> (i32, i32) {
    %c0_i32 = arith.constant 0 : i32
    %c0_i32_0 = arith.constant 0 : i32
    return %arg0, %c0_i32 : i32, i32
  }
}

</mosaic_0001>

<llo_original>
// kernel: tpu_custom_call.1
$region0: #{tpu_custom_call.1}
  #allocation0 [shape = 'u32[]', space=smem, size = 0x4, offset = 0x4, fixed_abs, tag = 'smem constant byte address 0x4 - core index']
  #allocation1 [shape = 'u32[144,128]{1,0:T(1,128)}', space=vmem, size = 0x12000, scoped, tag = 'internal scratch']
  #allocation2 [shape = 'f32[2,32]{1,0:T(2,128)}', space=vmem, size = 0x400, scoped, tag = 'scratch operand']
  %s0 = inlined_call_operand.vmem [shape: f32[2,8,32], index: 0, kind: input, shape index: {}]
  %s1 = inlined_call_operand.vmem [shape: f32[32,8], index: 1, kind: input, shape index: {}]
  %s2 = inlined_call_operand.vmem [shape: f32[1,8], index: 2, kind: input, shape index: {}]
  %s3 = inlined_call_operand.vmem [shape: f32[8,128], index: 3, kind: input, shape index: {}]
  %s4 = inlined_call_operand.vmem [shape: f32[1,128], index: 4, kind: input, shape index: {}]
  %s5 = inlined_call_operand.hbm [shape: f32[2,128], index: 5, kind: output, shape index: {}]
  %s6 = sld [smem:[#allocation0]]
  $region38: #{tpu_custom_call.1} parent=0
    _
  %s8 = ssub.s32 1, %s6
  %s9 = scalar_select 0, %s8, %s6
  $region1: #{tpu_custom_call.1} parent=0
    #allocation3 [shape = 'u8[1024]{0}', space=vmem, size = 0x400, scoped, tag = 'output window, operand 0, single buffered']
    #allocation4 [shape = 's32[1]{0}', space=sflag, size = 0x4, scoped, tag = 'scoped memory for tpu_custom_call.1']
    %10 = vsyncpa [#allocation4], 0
    // Predicated region
    $region2: #{tpu_custom_call.1} parent=1 // pred_check
      _
    $region3: #{tpu_custom_call.1} parent=1 // pred_check_branch
      %12 = sbr.rel (0) target = $region5
    $region4: #{tpu_custom_call.1} parent=1 // pred_region
      _
    $region5: #{tpu_custom_call.1} parent=1 // pred_fallthru
      _
    // Predicated region
    $region6: #{tpu_custom_call.1} parent=1 // pred_check
      _
    $region7: #{tpu_custom_call.1} parent=1 // pred_check_branch
      %14 = sbr.rel (0) target = $region9
    $region8: #{tpu_custom_call.1} parent=1 // pred_region
      _
    $region9: #{tpu_custom_call.1} parent=1 // pred_fallthru
      _
    // Predicated region
    $region10: #{tpu_custom_call.1} parent=1 // pred_check
      _
    $region11: #{tpu_custom_call.1} parent=1 // pred_check_branch
      %16 = sbr.rel (0) target = $region13
    $region12: #{tpu_custom_call.1} parent=1 // pred_region
      _
    $region13: #{tpu_custom_call.1} parent=1 // pred_fallthru
      _
    // Predicated region
    $region14: #{tpu_custom_call.1} parent=1 // pred_check
      _
    $region15: #{tpu_custom_call.1} parent=1 // pred_check_branch
      %18 = sbr.rel (0) target = $region17
    $region16: #{tpu_custom_call.1} parent=1 // pred_region
      _
    $region17: #{tpu_custom_call.1} parent=1 // pred_fallthru
      _
    // Predicated region
    $region18: #{tpu_custom_call.1} parent=1 // pred_check
      _
    $region19: #{tpu_custom_call.1} parent=1 // pred_check_branch
      %20 = sbr.rel (0) target = $region21
    $region20: #{tpu_custom_call.1} parent=1 // pred_region
      _
    $region21: #{tpu_custom_call.1} parent=1 // pred_fallthru
      _
    %p21 = scmp.eq.s32.totalorder 0, 0
    // Predicated region
    $region22: #{tpu_custom_call.1} parent=1 // pred_check
      %p22 = pneg %p21
    $region23: #{tpu_custom_call.1} parent=1 // pred_check_branch
      %24 = sbr.rel (%p22) target = $region25
    $region24: #{tpu_custom_call.1} parent=1 // pred_region
      %vm25 = vcmask 254976
      %26 = vst.msk [vmem:[#allocation2] sm:$0x3] %vm25, 0.0
    $region25: #{tpu_custom_call.1} parent=1 // pred_fallthru
      _
    %v27 = vld [vmem:[#allocation2] sm:$0x3]
    %v28 = vld [vmem:[%s0] sm:$0xff]
    %v29 = vld [vmem:[%s0 + $0x8] sm:$0xff]
    %vm30 = vcmask 261120
    %v31 = vsel %vm30, %v28, 0.0
    %v32 = vrot.slane %v31, 4
    %v33 = vadd.f32 %v31, %v32
    %v34 = vrot.slane %v33, 2
    %v35 = vadd.f32 %v33, %v34
    %v36 = vrot.slane %v35, 1
    %v37 = vadd.f32 %v35, %v36
    %v38 = vsel %vm30, %v29, 0.0
    %v39 = vrot.slane %v38, 4
    %v40 = vadd.f32 %v38, %v39
    %v41 = vrot.slane %v40, 2
    %v42 = vadd.f32 %v40, %v41
    %v43 = vrot.slane %v42, 1
    %v44 = vadd.f32 %v42, %v43
    %vm47 = vcmask 1041409
    %v48 = vsel %vm47, %v44, %v37
    %v50 = vadd.f32 %v27, %v48
    %vm51 = vcmask 254976
    %52 = vst.msk [vmem:[#allocation2] sm:$0x3] %vm51, %v50
    // Predicated region
    $region26: #{tpu_custom_call.1} parent=1 // pred_check
      %p53 = pneg %p21
    $region27: #{tpu_custom_call.1} parent=1 // pred_check_branch
      %55 = sbr.rel (%p53) target = $region29
    $region28: #{tpu_custom_call.1} parent=1 // pred_region
      %v56 = vld [vmem:[#allocation2] sm:$0x3]
      %v57 = vmul.f32 %v56, 0.125
      %v58 = vld [vmem:[%s1] sm:$0xff]
      %v59 = vld [vmem:[%s1 + $0x8] sm:$0xff]
      %v60 = vld [vmem:[%s1 + $0x10] sm:$0xff]
      %v61 = vld [vmem:[%s1 + $0x18] sm:$0xff]
      %v62 = vld [vmem:[%s2] sm:$0x1]
      %v64 = vlaneseq
      %v65 = vshrl.u32 %v64, 7
      %v66 = vsub.s32 0, %v65
      %v67 = vrot.slane %v62, %v66
      %v70 = vsel %vm30, %v57, 0
      %72 = vmatprep.subr.mxu0 0.0
      %73 = vmatpush1.msra.mxu0 %v58
      %74 = vmatprep.subr.mxu0 0.0
      %75 = vmatpush1.msra.mxu0 %v59
      %76 = vmatprep.subr.mxu0 0.0
      %77 = vmatpush1.msra.mxu0 %v60
      %78 = vmatprep.subr.mxu0 0.0
      %79 = vmatpush1.msra.mxu0 %v61
      %80 = vmatprep.subr.mxu0 0.0
      %81 = vmatpush1.msra.mxu0 0.0
      %82 = vmatprep.subr.mxu0 0.0
      %83 = vmatpush1.msra.mxu0 0.0
      %84 = vmatprep.subr.mxu0 0.0
      %85 = vmatpush1.msra.mxu0 0.0
      %86 = vmatprep.subr.mxu0 0.0
      %87 = vmatpush1.msra.mxu0 0.0
      %88 = vmatprep.subr.mxu0 0.0
      %89 = vmatpush1.msra.mxu0 0.0
      %90 = vmatprep.subr.mxu0 0.0
      %91 = vmatpush1.msra.mxu0 0.0
      %92 = vmatprep.subr.mxu0 0.0
      %93 = vmatpush1.msra.mxu0 0.0
      %94 = vmatprep.subr.mxu0 0.0
      %95 = vmatpush1.msra.mxu0 0.0
      %96 = vmatprep.subr.mxu0 0.0
      %97 = vmatpush1.msra.mxu0 0.0
      %98 = vmatprep.subr.mxu0 0.0
      %99 = vmatpush1.msra.mxu0 0.0
      %100 = vmatprep.subr.mxu0 0.0
      %101 = vmatpush1.msra.mxu0 0.0
      %102 = vmatprep.subr.mxu0 0.0
      %103 = vmatpush1.msra.mxu0 0.0
      %104 = vmatprep.subr.mxu0 0.0
      %105 = vmatpush1.msra.mxu0 0.0
      %106 = vmatprep.subr.mxu0 0.0
      %107 = vmatpush1.msra.mxu0 0.0
      %108 = vmatprep.subr.mxu0 0.0
      %109 = vmatpush1.msra.mxu0 0.0
      %110 = vmatprep.subr.mxu0 0.0
      %111 = vmatpush1.msra.mxu0 0.0
      %112 = vmatprep.subr.mxu0 0.0
      %113 = vmatpush1.msra.mxu0 0.0
      %114 = vmatprep.subr.mxu0 0.0
      %115 = vmatpush1.msra.mxu0 0.0
      %116 = vmatprep.subr.mxu0 0.0
      %117 = vmatpush1.msra.mxu0 0.0
      %118 = vmatprep.subr.mxu0 0.0
      %119 = vmatpush1.msra.mxu0 0.0
      %120 = vmatprep.subr.mxu0 0.0
      %121 = vmatpush1.msra.mxu0 0.0
      %122 = vmatprep.subr.mxu0 0.0
      %123 = vmatpush1.msra.mxu0 0.0
      %124 = vmatprep.subr.mxu0 0.0
      %125 = vmatpush1.msra.mxu0 0.0
      %126 = vmatprep.subr.mxu0 0.0
      %127 = vmatpush1.msra.mxu0 0.0
      %128 = vmatprep.subr.mxu0 0.0
      %129 = vmatpush1.msra.mxu0 0.0
      %130 = vmatprep.subr.mxu0 0.0
      %131 = vmatpush1.msra.mxu0 0.0
      %132 = vmatprep.subr.mxu0 0.0
      %133 = vmatpush1.msra.mxu0 0.0
      %134 = vmatprep.subr.mxu0 0.0
      %135 = vmatpush1.msra.mxu0 0.0
      %136 = vmatprep.mubr.f32.mxu0 0.0
      %137 = vmatmul.mubr.f32.gmra.mrb[0].mxu0 %v70
      %v138 = vpop.f32.mrb[0].mxu0
      %v139 = vadd.f32 %v67, %v138
      %v140 = vpop.f32.mrb[0].mxu0
      %141 = vdwg.mxu0
      %v142 = vmax.f32 %v139, 0.0
      %v143 = vld [vmem:[%s3] sm:$0xff]
      %v144 = vld [vmem:[%s4] sm:$0x1]
      %v146 = vlaneseq
      %v147 = vshrl.u32 %v146, 7
      %v148 = vsub.s32 0, %v147
      %v149 = vrot.slane %v144, %v148
      %vm151 = vcmask 64512
      %v153 = vsel %vm151, %v142, 0
      %155 = vmatprep.subr.mxu0 0.0
      %156 = vmatpush1.msra.mxu0 %v143
      %157 = vmatprep.subr.mxu0 0.0
      %158 = vmatpush1.msra.mxu0 0.0
      %159 = vmatprep.subr.mxu0 0.0
      %160 = vmatpush1.msra.mxu0 0.0
      %161 = vmatprep.subr.mxu0 0.0
      %162 = vmatpush1.msra.mxu0 0.0
      %163 = vmatprep.subr.mxu0 0.0
      %164 = vmatpush1.msra.mxu0 0.0
      %165 = vmatprep.subr.mxu0 0.0
      %166 = vmatpush1.msra.mxu0 0.0
      %167 = vmatprep.subr.mxu0 0.0
      %168 = vmatpush1.msra.mxu0 0.0
      %169 = vmatprep.subr.mxu0 0.0
      %170 = vmatpush1.msra.mxu0 0.0
      %171 = vmatprep.subr.mxu0 0.0
      %172 = vmatpush1.msra.mxu0 0.0
      %173 = vmatprep.subr.mxu0 0.0
      %174 = vmatpush1.msra.mxu0 0.0
      %175 = vmatprep.subr.mxu0 0.0
      %176 = vmatpush1.msra.mxu0 0.0
      %177 = vmatprep.subr.mxu0 0.0
      %178 = vmatpush1.msra.mxu0 0.0
      %179 = vmatprep.subr.mxu0 0.0
      %180 = vmatpush1.msra.mxu0 0.0
      %181 = vmatprep.subr.mxu0 0.0
      %182 = vmatpush1.msra.mxu0 0.0
      %183 = vmatprep.subr.mxu0 0.0
      %184 = vmatpush1.msra.mxu0 0.0
      %185 = vmatprep.subr.mxu0 0.0
      %186 = vmatpush1.msra.mxu0 0.0
      %187 = vmatprep.subr.mxu0 0.0
      %188 = vmatpush1.msra.mxu0 0.0
      %189 = vmatprep.subr.mxu0 0.0
      %190 = vmatpush1.msra.mxu0 0.0
      %191 = vmatprep.subr.mxu0 0.0
      %192 = vmatpush1.msra.mxu0 0.0
      %193 = vmatprep.subr.mxu0 0.0
      %194 = vmatpush1.msra.mxu0 0.0
      %195 = vmatprep.subr.mxu0 0.0
      %196 = vmatpush1.msra.mxu0 0.0
      %197 = vmatprep.subr.mxu0 0.0
      %198 = vmatpush1.msra.mxu0 0.0
      %199 = vmatprep.subr.mxu0 0.0
      %200 = vmatpush1.msra.mxu0 0.0
      %201 = vmatprep.subr.mxu0 0.0
      %202 = vmatpush1.msra.mxu0 0.0
      %203 = vmatprep.subr.mxu0 0.0
      %204 = vmatpush1.msra.mxu0 0.0
      %205 = vmatprep.subr.mxu0 0.0
      %206 = vmatpush1.msra.mxu0 0.0
      %207 = vmatprep.subr.mxu0 0.0
      %208 = vmatpush1.msra.mxu0 0.0
      %209 = vmatprep.subr.mxu0 0.0
      %210 = vmatpush1.msra.mxu0 0.0
      %211 = vmatprep.subr.mxu0 0.0
      %212 = vmatpush1.msra.mxu0 0.0
      %213 = vmatprep.subr.mxu0 0.0
      %214 = vmatpush1.msra.mxu0 0.0
      %215 = vmatprep.subr.mxu0 0.0
      %216 = vmatpush1.msra.mxu0 0.0
      %217 = vmatprep.subr.mxu0 0.0
      %218 = vmatpush1.msra.mxu0 0.0
      %219 = vmatprep.mubr.f32.mxu0 0.0
      %220 = vmatmul.mubr.f32.gmra.mrb[0].mxu0 %v153
      %v221 = vpop.f32.mrb[0].mxu0
      %v222 = vadd.f32 %v149, %v221
      %v223 = vpop.f32.mrb[0].mxu0
      %224 = vdwg.mxu0
      %225 = vst [vmem:[#allocation3] sm:$0x3] %v222
    $region29: #{tpu_custom_call.1} parent=1 // pred_fallthru
      _
    // Predicated region
    $region30: #{tpu_custom_call.1} parent=1 // pred_check
      _
    $region31: #{tpu_custom_call.1} parent=1 // pred_check_branch
      %227 = sbr.rel (0) target = $region33
    $region32: #{tpu_custom_call.1} parent=1 // pred_region
      %s229 = ssub.s32 32, 32
      %230 = vsyncadd [#allocation4], %s229
      %s232 = sshll.u32 [#allocation3], 4
      %s233 = int_to_ptr.vmem [resolvable:$true] %s232
      %235 = dma.vmem_to_hbm [thread:$0]  %s233, 32, %s5, [#allocation4]
    $region33: #{tpu_custom_call.1} parent=1 // pred_fallthru
      _
    // Predicated region
    $region34: #{tpu_custom_call.1} parent=1 // pred_check
      _
    $region35: #{tpu_custom_call.1} parent=1 // pred_check_branch
      %237 = sbr.rel (0) target = $region37
    $region36: #{tpu_custom_call.1} parent=1 // pred_region
      %238 = dma.done [#allocation4], 32
    $region37: #{tpu_custom_call.1} parent=1 // pred_fallthru
      _
    %239 = vsyncpa [#allocation4], 1

</llo_original>
